<compile_context>
chip_gen: v7x
topology: tpu7x:2x2x1
jax: 0.10.0
libtpu: 0.0.40
codegen_flags: <defaults>
</compile_context>

<pallas_src>
import jax
import jax.numpy as jnp
from jax import lax
from jax.experimental import pallas as pl
from jax.experimental.pallas import tpu as pltpu


NBUF = 8  # in-flight row DMAs per token tile (ring of DMA semaphores)


def embed_gather_kernel(ids_ref, table_hbm, out_ref, copy_sems):
    # ids_ref:   (N_pad,)       int32, SMEM (scalar-prefetched); dropped/padded
    #                            positions already remapped to the zero row.
    # table_hbm: (V+1, D_pad)   table + zero sentinel row, resident in HBM.
    # out_ref:   (TM, D_pad)    VMEM output block for this token tile.
    # copy_sems: (NBUF,)        DMA semaphore ring.
    i = pl.program_id(0)
    tm = out_ref.shape[0]
    nbuf = min(NBUF, tm)
    base = i * tm

    def row_copy(r):
        row = ids_ref[base + r]
        return pltpu.make_async_copy(
            table_hbm.at[pl.ds(row, 1)],   # (1, D_pad) row in HBM
            out_ref.at[pl.ds(r, 1)],       # (1, D_pad) row of the out tile
            copy_sems.at[r % nbuf],
        )

    # Prime the ring: nbuf row DMAs in flight.
    @pl.loop(0, nbuf)
    def _prime(r):
        row_copy(r).start()

    # Steady state: wait row r, immediately refill its semaphore slot with
    # row r + nbuf.  At most one outstanding DMA per semaphore.
    @pl.loop(0, tm)
    def _gather(r):
        row_copy(r).wait()

        @pl.when(r + nbuf < tm)
        def _():
            row_copy(r + nbuf).start()


def _round_up(x, m):
    return (x + m - 1) // m * m


def word_embedding_forward(ids, lengths, table, *, tm=256):
    """ids: [B, T] int (padded with 0), lengths: [B] int32, table: [V, D] float.

    Returns (embeds [B, T, D] with dropped positions zeroed, lengths).
    """
    B, T = ids.shape
    V, D = table.shape
    N = B * T

    # Lane-dense D (unmasked full-lane stores / DMAs); sliced off at the end.
    d_pad = _round_up(D, 128)
    table_p = table if d_pad == D else jnp.pad(table, ((0, 0), (0, d_pad - D)))

    # Append an all-zero sentinel row: dropped / padded positions gather it,
    # which implements pack_padded_sequence's "drop" with no masking.
    zero_row = V
    table_p = jnp.concatenate(
        [table_p, jnp.zeros((1, d_pad), table_p.dtype)], axis=0)

    valid = jnp.arange(T)[None, :] < lengths[:, None]
    ids32 = ids.astype(jnp.int32)
    # TODO(synk): torch raises on out-of-range ids; we clamp to stay in-bounds
    #             for the DMA (bounds-checked) instead of erroring.
    ids32 = jnp.clip(ids32, 0, V - 1)
    ids_flat = jnp.where(valid, ids32, zero_row).reshape(N)

    # Token tiling: flatten (B, T) -> one token axis, pad to a multiple of tm.
    # (For v6e/v5e feel free to raise tm; for v7x keep >=2 tiles when N allows.)
    tm = max(8, min(tm, _round_up(N, 8)))
    n_pad = _round_up(N, tm)
    ids_flat = jnp.pad(ids_flat, (0, n_pad - N), constant_values=zero_row)

    grid = (n_pad // tm,)

    out = pl.pallas_call(
        embed_gather_kernel,
        out_shape=jax.ShapeDtypeStruct((n_pad, d_pad), table.dtype),
        grid_spec=pltpu.PrefetchScalarGridSpec(
            num_scalar_prefetch=1,                      # ids -> SMEM
            grid=grid,
            in_specs=[pl.BlockSpec(memory_space=pl.ANY)],   # table stays in HBM
            out_specs=pl.BlockSpec((tm, d_pad), lambda i, ids: (i, 0)),
            scratch_shapes=[pltpu.SemaphoreType.DMA((NBUF,))],
        ),
        compiler_params=pltpu.CompilerParams(
            dimension_semantics=("parallel",),
            vmem_limit_bytes=32 * 1024 * 1024,   # safe on v5e/v6e/v7x; usage is tiny
        ),
    )(ids_flat, table_p)

    out = out[:N, :D].reshape(B, T, D)
    return out, lengths


if __name__ == "__main__":
    key = jax.random.PRNGKey(0)
    k_tbl, k_ids = jax.random.split(key)

    # Small but layout-realistic shapes (D multiple of 128 -> lane-dense output).
    vocab_size = 512
    embedding_dim = 128
    batch = 2
    max_len = 8

    # nn.Embedding default init: N(0, 1).
    table = jax.random.normal(k_tbl, (vocab_size, embedding_dim), dtype=jnp.float32)

    # Sorted-descending lengths (pack_padded_sequence default enforce_sorted=True).
    lengths = jnp.array([8, 5], dtype=jnp.int32)

    ids = jax.random.randint(k_ids, (batch, max_len), 0, vocab_size, dtype=jnp.int32)
    # padding_value=0 for positions beyond each sentence length.
    valid = jnp.arange(max_len)[None, :] < lengths[:, None]
    ids = jnp.where(valid, ids, 0)

    # tm=8 -> 2 token tiles of 8 rows each: exercises the grid and the DMA ring.
    out, out_lengths = word_embedding_forward(ids, lengths, table, tm=8)
    out = jax.block_until_ready(out)

    # Pure-JAX reference: embedding lookup + zero the dropped (padded) positions.
    ref = jnp.take(table, ids, axis=0) * valid.astype(table.dtype)[..., None]
    assert out.shape == (batch, max_len, embedding_dim)
    assert jnp.allclose(out, ref, atol=1e-6, rtol=1e-6), "mismatch vs reference"

    print("KERNEL_OK")
</pallas_src>

<mosaic_0001>
module attributes {stable_mosaic.version = 11 : i64} {
  func.func @embed_gather_kernel(%arg0: i32, %arg1: memref<16xi32, #tpu.memory_space<smem>>, %arg2: memref<513x128xf32, #tpu.memory_space<any>>, %arg3: memref<8x128xf32, #tpu.memory_space<vmem>>, %arg4: memref<8x!tpu.dma_semaphore, #tpu.memory_space<semaphore_mem>>) attributes {dimension_semantics = [#tpu.dimension_semantics<parallel>], iteration_bounds = array<i64: 2>, scalar_prefetch = 1 : i64, scratch_operands = 1 : i64, tpu.core_type = #tpu.core_type<tc>, window_params = [{}, {transform_indices = @transform_1, window_bounds = array<i64: 8, 128>}]} {
    %c8_i32 = arith.constant 8 : i32
    %0 = arith.muli %arg0, %c8_i32 : i32
    %c0_i32 = arith.constant 0 : i32
    %c8_i32_0 = arith.constant 8 : i32
    %1 = arith.addi %c0_i32, %c8_i32_0 : i32
    %c1_i32 = arith.constant 1 : i32
    scf.for %arg5 = %c0_i32 to %1 step %c1_i32  : i32 {
      %c1_i32_6 = arith.constant 1 : i32
      %3 = arith.muli %arg5, %c1_i32_6 : i32
      %c0_i32_7 = arith.constant 0 : i32
      %4 = arith.addi %c0_i32_7, %3 : i32
      %5 = arith.addi %0, %4 : i32
      %6 = arith.index_cast %5 : i32 to index
      %7 = memref.load %arg1[%6] : memref<16xi32, #tpu.memory_space<smem>>
      %c8_i32_8 = arith.constant 8 : i32
      %c0_i32_9 = arith.constant 0 : i32
      %8 = arith.cmpi eq, %c8_i32_8, %c0_i32_9 : i32
      %c1_i32_10 = arith.constant 1 : i32
      %9 = arith.select %8, %c1_i32_10, %c8_i32_8 : i32
      %10 = arith.remsi %4, %9 : i32
      %c0_i32_11 = arith.constant 0 : i32
      %11 = arith.cmpi ne, %10, %c0_i32_11 : i32
      %c0_i32_12 = arith.constant 0 : i32
      %12 = arith.cmpi slt, %10, %c0_i32_12 : i32
      %c0_i32_13 = arith.constant 0 : i32
      %13 = arith.cmpi slt, %9, %c0_i32_13 : i32
      %14 = arith.xori %12, %13 : i1
      %15 = arith.andi %14, %11 : i1
      %16 = arith.addi %10, %9 : i32
      %17 = arith.select %15, %16, %10 : i32
      %c0_i32_14 = arith.constant 0 : i32
      %18 = tpu.memref_slice %arg2[%7, %c0_i32_14] : memref<513x128xf32, #tpu.memory_space<any>> -> memref<1x128xf32, #tpu.memory_space<any>>
      %c0_i32_15 = arith.constant 0 : i32
      %19 = tpu.memref_slice %arg3[%4, %c0_i32_15] : memref<8x128xf32, #tpu.memory_space<vmem>> -> memref<1x128xf32, #tpu.memory_space<vmem>>
      %20 = tpu.memref_slice %arg4[%17] : memref<8x!tpu.dma_semaphore, #tpu.memory_space<semaphore_mem>> -> memref<1x!tpu.dma_semaphore, #tpu.memory_space<semaphore_mem>>
      %21 = tpu.memref_squeeze %20 : memref<1x!tpu.dma_semaphore, #tpu.memory_space<semaphore_mem>> -> memref<!tpu.dma_semaphore, #tpu.memory_space<semaphore_mem>>
      tpu.enqueue_dma source(%18 : memref<1x128xf32, #tpu.memory_space<any>>) target(%19 : memref<1x128xf32, #tpu.memory_space<vmem>>) target_semaphore(%21 : memref<!tpu.dma_semaphore, #tpu.memory_space<semaphore_mem>>)
    }
    %c8_i32_1 = arith.constant 8 : i32
    %c0_i32_2 = arith.constant 0 : i32
    %c8_i32_3 = arith.constant 8 : i32
    %2 = arith.addi %c0_i32_2, %c8_i32_3 : i32
    %c1_i32_4 = arith.constant 1 : i32
    scf.for %arg5 = %c0_i32_2 to %2 step %c1_i32_4  : i32 {
      %c1_i32_6 = arith.constant 1 : i32
      %3 = arith.muli %arg5, %c1_i32_6 : i32
      %c0_i32_7 = arith.constant 0 : i32
      %4 = arith.addi %c0_i32_7, %3 : i32
      %5 = arith.addi %0, %4 : i32
      %6 = arith.index_cast %5 : i32 to index
      %7 = memref.load %arg1[%6] : memref<16xi32, #tpu.memory_space<smem>>
      %c8_i32_8 = arith.constant 8 : i32
      %c0_i32_9 = arith.constant 0 : i32
      %8 = arith.cmpi eq, %c8_i32_8, %c0_i32_9 : i32
      %c1_i32_10 = arith.constant 1 : i32
      %9 = arith.select %8, %c1_i32_10, %c8_i32_8 : i32
      %10 = arith.remsi %4, %9 : i32
      %c0_i32_11 = arith.constant 0 : i32
      %11 = arith.cmpi ne, %10, %c0_i32_11 : i32
      %c0_i32_12 = arith.constant 0 : i32
      %12 = arith.cmpi slt, %10, %c0_i32_12 : i32
      %c0_i32_13 = arith.constant 0 : i32
      %13 = arith.cmpi slt, %9, %c0_i32_13 : i32
      %14 = arith.xori %12, %13 : i1
      %15 = arith.andi %14, %11 : i1
      %16 = arith.addi %10, %9 : i32
      %17 = arith.select %15, %16, %10 : i32
      %c0_i32_14 = arith.constant 0 : i32
      %18 = tpu.memref_slice %arg2[%7, %c0_i32_14] : memref<513x128xf32, #tpu.memory_space<any>> -> memref<1x128xf32, #tpu.memory_space<any>>
      %c0_i32_15 = arith.constant 0 : i32
      %19 = tpu.memref_slice %arg3[%4, %c0_i32_15] : memref<8x128xf32, #tpu.memory_space<vmem>> -> memref<1x128xf32, #tpu.memory_space<vmem>>
      %20 = tpu.memref_slice %arg4[%17] : memref<8x!tpu.dma_semaphore, #tpu.memory_space<semaphore_mem>> -> memref<1x!tpu.dma_semaphore, #tpu.memory_space<semaphore_mem>>
      %21 = tpu.memref_squeeze %20 : memref<1x!tpu.dma_semaphore, #tpu.memory_space<semaphore_mem>> -> memref<!tpu.dma_semaphore, #tpu.memory_space<semaphore_mem>>
      tpu.wait_dma2 semaphore(%21 : memref<!tpu.dma_semaphore, #tpu.memory_space<semaphore_mem>>) src(%18 : memref<1x128xf32, #tpu.memory_space<any>>) dst(%19 : memref<1x128xf32, #tpu.memory_space<vmem>>)
      %c8_i32_16 = arith.constant 8 : i32
      %22 = arith.addi %4, %c8_i32_16 : i32
      %c8_i32_17 = arith.constant 8 : i32
      %23 = arith.cmpi slt, %22, %c8_i32_17 : i32
      %24 = arith.extui %23 : i1 to i32
      %c0_i32_18 = arith.constant 0 : i32
      %25 = arith.cmpi ne, %24, %c0_i32_18 : i32
      scf.if %25 {
        %c8_i32_19 = arith.constant 8 : i32
        %26 = arith.addi %4, %c8_i32_19 : i32
        %27 = arith.addi %0, %26 : i32
        %28 = arith.index_cast %27 : i32 to index
        %29 = memref.load %arg1[%28] : memref<16xi32, #tpu.memory_space<smem>>
        %c8_i32_20 = arith.constant 8 : i32
        %c0_i32_21 = arith.constant 0 : i32
        %30 = arith.cmpi eq, %c8_i32_20, %c0_i32_21 : i32
        %c1_i32_22 = arith.constant 1 : i32
        %31 = arith.select %30, %c1_i32_22, %c8_i32_20 : i32
        %32 = arith.remsi %26, %31 : i32
        %c0_i32_23 = arith.constant 0 : i32
        %33 = arith.cmpi ne, %32, %c0_i32_23 : i32
        %c0_i32_24 = arith.constant 0 : i32
        %34 = arith.cmpi slt, %32, %c0_i32_24 : i32
        %c0_i32_25 = arith.constant 0 : i32
        %35 = arith.cmpi slt, %31, %c0_i32_25 : i32
        %36 = arith.xori %34, %35 : i1
        %37 = arith.andi %36, %33 : i1
        %38 = arith.addi %32, %31 : i32
        %39 = arith.select %37, %38, %32 : i32
        %c0_i32_26 = arith.constant 0 : i32
        %40 = tpu.memref_slice %arg2[%29, %c0_i32_26] : memref<513x128xf32, #tpu.memory_space<any>> -> memref<1x128xf32, #tpu.memory_space<any>>
        %c0_i32_27 = arith.constant 0 : i32
        %41 = tpu.memref_slice %arg3[%26, %c0_i32_27] : memref<8x128xf32, #tpu.memory_space<vmem>> -> memref<1x128xf32, #tpu.memory_space<vmem>>
        %42 = tpu.memref_slice %arg4[%39] : memref<8x!tpu.dma_semaphore, #tpu.memory_space<semaphore_mem>> -> memref<1x!tpu.dma_semaphore, #tpu.memory_space<semaphore_mem>>
        %43 = tpu.memref_squeeze %42 : memref<1x!tpu.dma_semaphore, #tpu.memory_space<semaphore_mem>> -> memref<!tpu.dma_semaphore, #tpu.memory_space<semaphore_mem>>
        tpu.enqueue_dma source(%40 : memref<1x128xf32, #tpu.memory_space<any>>) target(%41 : memref<1x128xf32, #tpu.memory_space<vmem>>) target_semaphore(%43 : memref<!tpu.dma_semaphore, #tpu.memory_space<semaphore_mem>>)
      } else {
      }
    }
    %c8_i32_5 = arith.constant 8 : i32
    return
  }
  func.func @transform_1(%arg0: i32, %arg1: memref<16xi32, #tpu.memory_space<smem>>) -> (i32, i32) {
    %c0_i32 = arith.constant 0 : i32
    %c0_i32_0 = arith.constant 0 : i32
    return %arg0, %c0_i32 : i32, i32
  }
}

</mosaic_0001>

<llo_original>
// kernel: tpu_custom_call.1
$region0: #{tpu_custom_call.1}
  #allocation0 [shape = 'u32[]', space=smem, size = 0x4, offset = 0x4, fixed_abs, tag = 'smem constant byte address 0x4 - core index']
  #allocation1 [shape = 'u32[144,128]{1,0:T(1,128)}', space=vmem, size = 0x12000, scoped, tag = 'internal scratch']
  #allocation2 [shape = 's32[8]{0}', space=sflag, size = 0x20, scoped, tag = 'scratch operand']
  #allocation3 [shape = 's32[1]{0}', space=sflag, size = 0x4, scoped, tag = 'scoped memory for tpu_custom_call.1']
  #allocation4 [shape = 'u8[512]{0}', space=smem, size = 0x200, scoped, tag = 'prefetched SMEM operand 0']
  #allocation7 [shape = 's32[]', space=sflag, size = 0x4, offset = 0, fixed_abs, tag = 'sflag constant byte address 0x0 - dummy sync flag']
  #allocation8 [shape = 's32[]', space=sflag, size = 0x4, offset = 0, fixed_abs, tag = 'sflag constant byte address 0x0 - dummy sync flag']
  #allocation9 [shape = 'u32[]', space=smem, size = 0x4, offset = 0x44, fixed_abs, tag = 'smem constant byte address 0x44 - assertion arg 0']
  #allocation10 [shape = 'u32[]', space=smem, size = 0x4, offset = 0x48, fixed_abs, tag = 'smem constant byte address 0x48 - assertion arg 1']
  #allocation11 [shape = 's32[]', space=sflag, size = 0x4, offset = 0, fixed_abs, tag = 'sflag constant byte address 0x0 - dummy sync flag']
  #allocation12 [shape = 's32[]', space=sflag, size = 0x4, offset = 0, fixed_abs, tag = 'sflag constant byte address 0x0 - dummy sync flag']
  %s0 = inlined_call_operand.hbm [shape: s32[16], index: 0, kind: input, shape index: {}]
  %s1 = inlined_call_operand.hbm [shape: f32[513,128], index: 1, kind: input, shape index: {}]
  %s2 = inlined_call_operand.hbm [shape: f32[16,128], index: 2, kind: output, shape index: {}]
  %s3 = sld [smem:[#allocation0]]
  $region51: #{tpu_custom_call.1} parent=0
    _
  %s5 = ssub.s32 1, %s3
  %s6 = scalar_select 0, %s5, %s3
  %8 = dma.hbm_to_smem %s0, 16, [#allocation4], [#allocation3]
  %9 = dma.done [#allocation3], 16
  %10 = sfence
  $region1: #{tpu_custom_call.1} parent=0
    #allocation5 [shape = 'u8[8192]{0}', space=vmem, size = 0x2000, scoped, tag = 'output window, operand 0']
    #allocation6 [shape = 's32[2]{0}', space=sflag, size = 0x8, scoped, tag = 'scoped memory for tpu_custom_call.1']
    %11 = vsyncpa [#allocation6], 0
    %s12 = scalar_lea.sflag [#allocation6], 1
    %13 = vsyncpa %s12, 0
    loop: start=0, step=1, limit=3
    $region2: #{tpu_custom_call.1} parent=1 // loop_pre_header
      _
    $region3: #{tpu_custom_call.1} parent=1 // loop_header
      %s15 = sphi 0, %s19
      %p16 = scmp.ge.s32.totalorder %s15, 3
      %s24 = sphi 0, %s26
      %s27 = sphi 0, %s24
      %s37 = sphi 0, %s27
    $region4: #{tpu_custom_call.1} parent=1 // loop_header_branch
      %18 = sbr.rel (%p16) target = $region8
    $region5: #{tpu_custom_call.1} parent=1 // loop_body
      %s20 = ssub.s32 %s15, 1
      %s21 = sadd.s32 %s15, 1
      %s22 = ssub.s32 %s15, %s21
      %p23 = scmp.eq.s32.totalorder %s22, 0
      %s25 = sadd.s32 %s24, 1
      %s26 = scalar_select %p23, %s24, %s25
      %p28 = pneg %p23
      %p29 = scmp.eq.s32.totalorder %s15, 1
      %p30 = por %p28, %p29
      %p31 = scmp.ne.s32.totalorder %s24, %s27
      %p32 = scmp.eq.s32.totalorder %s15, 0
      %p33 = por %p31, %p32
      %p34 = scmp.ne.s32.totalorder %s24, %s27
      %p35 = scmp.eq.s32.totalorder %s20, 1
      %p36 = por %p34, %p35
      %p38 = scmp.ne.s32.totalorder %s27, %s37
      %p39 = scmp.eq.s32.totalorder %s20, 0
      %p40 = por %p38, %p39
      %p41 = scmp.lt.s32.totalorder %s15, 2
      // Predicated region
      $region9: #{tpu_custom_call.1} parent=5 // pred_check
        %p42 = pneg %p41
      $region10: #{tpu_custom_call.1} parent=5 // pred_check_branch
        %44 = sbr.rel (%p42) target = $region12
      $region11: #{tpu_custom_call.1} parent=5 // pred_region
        %p45 = pneg %p33
        %p46 = pneg %p30
        %s47 = sand.u32 %s24, 1
        %s48 = scalar_lea.sflag [#allocation6], %s47
        %s49 = sand.u32 %s24, 1
        %s50 = smul.addr %s49, 8
        %s51 = scalar_lea.vmem [#allocation5], %s50
        %s52 = smul.u32 %s15, 8
        loop: start=0, step=1, limit=8
        $region13: #{tpu_custom_call.1} parent=11 // loop_pre_header
          _
        $region14: #{tpu_custom_call.1} parent=11 // loop_header
          %s54 = sphi 0, %s58
          %p55 = scmp.ge.s32.totalorder %s54, 8
        $region15: #{tpu_custom_call.1} parent=11 // loop_header_branch
          %57 = sbr.rel (%p55) target = $region19
        $region16: #{tpu_custom_call.1} parent=11 // loop_body
          %s59 = sadd.s32 %s52, %s54
          %s60 = sld [smem:[#allocation4 + %s59]]
          %p61 = scmp.lt.s32.totalorder %s54, 0
          %s62 = ssub.s32 0, %s54
          %s63 = scalar_select %p61, %s62, %s54
          %s64 = sand.u32 %s63, 7
          %s65 = ssub.s32 0, %s64
          %s66 = scalar_select %p61, %s65, %s64
          %p67 = scmp.ne.s32.totalorder %s66, 0
          %p68 = scmp.lt.s32.totalorder %s66, 0
          %p69 = pnand %p68, %p67
          %p70 = pneg %p69
          %s71 = sadd.s32 %s66, 8
          %s72 = scalar_select %p70, %s71, %s66
          %s73 = smul.addr %s60, 16
          %s74 = scalar_lea.hbm %s1, %s73
          %s75 = scalar_lea.vmem %s51, %s54 [#allocation5]
          %s76 = scalar_lea.sflag [#allocation2], %s72
          // Predicated region
          $region20: #{tpu_custom_call.1} parent=16 // pred_check
            _
          $region21: #{tpu_custom_call.1} parent=16 // pred_check_branch
            %78 = sbr.rel target = $region23
          $region22: #{tpu_custom_call.1} parent=16 // pred_region
            %79 = sst [smem:[#allocation9]] [#allocation8]
            %80 = sst [smem:[#allocation10]] [#allocation7]
          $region23: #{tpu_custom_call.1} parent=16 // pred_fallthru
            _
          %82 = shalt.err (0)
          %s84 = sshll.u32 %s75, 4
          %s85 = int_to_ptr.vmem [resolvable:$true] %s84
          %87 = dma.hbm_to_vmem [thread:$0]  %s74, 16, %s85, %s76
        $region17: #{tpu_custom_call.1} parent=11 // loop_footer
          %s58 = sadd.s32 1, %s54
        $region18: #{tpu_custom_call.1} parent=11 // loop_footer_branch
          %53 = sbr.rel target = $region14
        $region19: #{tpu_custom_call.1} parent=11 // loop_exit
          _
        loop: start=0, step=1, limit=8
        $region24: #{tpu_custom_call.1} parent=11 // loop_pre_header
          _
        $region25: #{tpu_custom_call.1} parent=11 // loop_header
          %s89 = sphi 0, %s93
          %p90 = scmp.ge.s32.totalorder %s89, 8
        $region26: #{tpu_custom_call.1} parent=11 // loop_header_branch
          %92 = sbr.rel (%p90) target = $region30
        $region27: #{tpu_custom_call.1} parent=11 // loop_body
          %s94 = sadd.s32 %s52, %s89
          %s95 = sld [smem:[#allocation4 + %s94]]
          %p96 = scmp.lt.s32.totalorder %s89, 0
          %s97 = ssub.s32 0, %s89
          %s98 = scalar_select %p96, %s97, %s89
          %s99 = sand.u32 %s98, 7
          %s100 = ssub.s32 0, %s99
          %s101 = scalar_select %p96, %s100, %s99
          %p102 = scmp.ne.s32.totalorder %s101, 0
          %p103 = scmp.lt.s32.totalorder %s101, 0
          %p104 = pnand %p103, %p102
          %p105 = pneg %p104
          %s106 = sadd.s32 %s101, 8
          %s107 = scalar_select %p105, %s106, %s101
          %s108 = scalar_lea.sflag [#allocation2], %s107
          %s109 = smul.u32 1, 1
          %s110 = sshll.u32 %s109, 4
          %111 = dma.done %s108, %s110
          %s112 = sadd.s32 %s89, 8
          %p113 = scmp.lt.s32.totalorder %s112, 8
          // Predicated region
          $region31: #{tpu_custom_call.1} parent=27 // pred_check
            %p114 = pneg %p113
          $region32: #{tpu_custom_call.1} parent=27 // pred_check_branch
            %116 = sbr.rel (%p114) target = $region34
          $region33: #{tpu_custom_call.1} parent=27 // pred_region
            %s117 = sadd.s32 %s52, %s112
            %s118 = sld [smem:[#allocation4 + %s117]]
            %p119 = scmp.lt.s32.totalorder %s112, 0
            %s120 = ssub.s32 0, %s112
            %s121 = scalar_select %p119, %s120, %s112
            %s122 = sand.u32 %s121, 7
            %s123 = ssub.s32 0, %s122
            %s124 = scalar_select %p119, %s123, %s122
            %p125 = scmp.ne.s32.totalorder %s124, 0
            %p126 = scmp.lt.s32.totalorder %s124, 0
            %p127 = pnand %p126, %p125
            %p128 = pneg %p127
            %s129 = sadd.s32 %s124, 8
            %s130 = scalar_select %p128, %s129, %s124
            %s131 = smul.addr %s118, 16
            %s132 = scalar_lea.hbm %s1, %s131
            %s133 = scalar_lea.vmem %s51, %s112 [#allocation5]
            %s134 = scalar_lea.sflag [#allocation2], %s130
            // Predicated region
            $region35: #{tpu_custom_call.1} parent=33 // pred_check
              _
            $region36: #{tpu_custom_call.1} parent=33 // pred_check_branch
              %136 = sbr.rel target = $region38
            $region37: #{tpu_custom_call.1} parent=33 // pred_region
              %137 = sst [smem:[#allocation9]] [#allocation12]
              %138 = sst [smem:[#allocation10]] [#allocation11]
            $region38: #{tpu_custom_call.1} parent=33 // pred_fallthru
              _
            %140 = shalt.err (0)
            %s142 = sshll.u32 %s133, 4
            %s143 = int_to_ptr.vmem [resolvable:$true] %s142
            %145 = dma.hbm_to_vmem [thread:$0]  %s132, 16, %s143, %s134
          $region34: #{tpu_custom_call.1} parent=27 // pred_fallthru
            _
        $region28: #{tpu_custom_call.1} parent=11 // loop_footer
          %s93 = sadd.s32 1, %s89
        $region29: #{tpu_custom_call.1} parent=11 // loop_footer_branch
          %88 = sbr.rel target = $region25
        $region30: #{tpu_custom_call.1} parent=11 // loop_exit
          _
        %s146 = sand.u32 %s24, 1
        %s147 = scalar_lea.sflag [#allocation6], %s146
        %s148 = sand.u32 %s24, 1
        %s149 = smul.addr %s148, 8
        %s150 = scalar_lea.vmem [#allocation5], %s149
        // Predicated region
        $region39: #{tpu_custom_call.1} parent=11 // pred_check
          %p151 = pneg %p30
        $region40: #{tpu_custom_call.1} parent=11 // pred_check_branch
          %153 = sbr.rel (%p151) target = $region42
        $region41: #{tpu_custom_call.1} parent=11 // pred_region
          %s155 = ssub.s32 128, 128
          %156 = vsyncadd %s147, %s155
          %s157 = smul.addr %s15, 128
          %s158 = scalar_lea.hbm %s2, %s157
          %s160 = sshll.u32 %s150, 4
          %s161 = int_to_ptr.vmem [resolvable:$true] %s160
          %163 = dma.vmem_to_hbm [thread:$0]  %s161, 128, %s158, %s147
        $region42: #{tpu_custom_call.1} parent=11 // pred_fallthru
          _
      $region12: #{tpu_custom_call.1} parent=5 // pred_fallthru
        _
      %p164 = scmp.le.s32.totalorder 1, %s15
      // Predicated region
      $region43: #{tpu_custom_call.1} parent=5 // pred_check
        %p165 = pneg %p164
      $region44: #{tpu_custom_call.1} parent=5 // pred_check_branch
        %167 = sbr.rel (%p165) target = $region46
      $region45: #{tpu_custom_call.1} parent=5 // pred_region
        %s168 = ssub.s32 %s15, 1
        // Predicated region
        $region47: #{tpu_custom_call.1} parent=45 // pred_check
          %p169 = pneg %p36
        $region48: #{tpu_custom_call.1} parent=45 // pred_check_branch
          %171 = sbr.rel (%p169) target = $region50
        $region49: #{tpu_custom_call.1} parent=45 // pred_region
          %s172 = sand.u32 %s27, 1
          %s173 = scalar_lea.sflag [#allocation6], %s172
          %s174 = sand.u32 %s27, 1
          %s175 = smul.addr %s174, 8
          %s176 = scalar_lea.vmem [#allocation5], %s175
          %177 = dma.done %s173, 128
        $region50: #{tpu_custom_call.1} parent=45 // pred_fallthru
          _
      $region46: #{tpu_custom_call.1} parent=5 // pred_fallthru
        _
    $region6: #{tpu_custom_call.1} parent=1 // loop_footer
      %s19 = sadd.s32 1, %s15
    $region7: #{tpu_custom_call.1} parent=1 // loop_footer_branch
      %14 = sbr.rel target = $region3
    $region8: #{tpu_custom_call.1} parent=1 // loop_exit
      _
    %178 = vsyncpa [#allocation6], 1
    %s179 = scalar_lea.sflag [#allocation6], 1
    %180 = vsyncpa %s179, 1
  %181 = vsyncmov [#allocation2]
  %s182 = vpop.sfrf %181
  %p183 = scmp.eq.s32.totalorder %s182, 0
  %p184 = pneg %p183
  %186 = shalt.err (%p184)
  %s187 = scalar_lea.sflag [#allocation2], 1
  %188 = vsyncmov %s187
  %s189 = vpop.sfrf %188
  %p190 = scmp.eq.s32.totalorder %s189, 0
  %p191 = pneg %p190
  %193 = shalt.err (%p191)
  %s194 = scalar_lea.sflag [#allocation2], 2
  %195 = vsyncmov %s194
  %s196 = vpop.sfrf %195
  %p197 = scmp.eq.s32.totalorder %s196, 0
  %p198 = pneg %p197
  %200 = shalt.err (%p198)
  %s201 = scalar_lea.sflag [#allocation2], 3
  %202 = vsyncmov %s201
  %s203 = vpop.sfrf %202
  %p204 = scmp.eq.s32.totalorder %s203, 0
  %p205 = pneg %p204
  %207 = shalt.err (%p205)
  %s208 = scalar_lea.sflag [#allocation2], 4
  %209 = vsyncmov %s208
  %s210 = vpop.sfrf %209
  %p211 = scmp.eq.s32.totalorder %s210, 0
  %p212 = pneg %p211
  %214 = shalt.err (%p212)
  %s215 = scalar_lea.sflag [#allocation2], 5
  %216 = vsyncmov %s215
  %s217 = vpop.sfrf %216
  %p218 = scmp.eq.s32.totalorder %s217, 0
  %p219 = pneg %p218
  %221 = shalt.err (%p219)
  %s222 = scalar_lea.sflag [#allocation2], 6
  %223 = vsyncmov %s222
  %s224 = vpop.sfrf %223
  %p225 = scmp.eq.s32.totalorder %s224, 0
  %p226 = pneg %p225
  %228 = shalt.err (%p226)
  %s229 = scalar_lea.sflag [#allocation2], 7
  %230 = vsyncmov %s229
  %s231 = vpop.sfrf %230
  %p232 = scmp.eq.s32.totalorder %s231, 0
  %p233 = pneg %p232
  %235 = shalt.err (%p233)

</llo_original>
